<compile_context>
chip_gen: v7x
topology: tpu7x:2x2x1
jax: 0.10.0
libtpu: 0.0.40
codegen_flags: <defaults>
</compile_context>

<pallas_src>
import functools
import math

import jax
import jax.numpy as jnp
from jax.experimental import pallas as pl
from jax.experimental.pallas import tpu as pltpu


# ------------------------------- tiling helper ------------------------------ #

def _tile(dim, target, align):
    """Pick a tile size for `dim`: `target` if it divides evenly, otherwise the
    largest multiple of `align` that divides `dim`, otherwise the full dim
    (a full-extent block is always a legal BlockSpec)."""
    if dim % target == 0:
        return target
    t = (target // align) * align
    while t >= align:
        if dim % t == 0:
            return t
        t -= align
    return dim


def _gelu(y):
    # TODO(synk): HF BERT uses exact erf-GELU; tanh approximation used here.
    c = 0.7978845608028654  # sqrt(2/pi)
    return 0.5 * y * (1.0 + jnp.tanh(c * (y + 0.044715 * y * y * y)))


# ------------------------- tiled matmul (+bias+act) -------------------------- #

def _matmul_kernel(x_ref, w_ref, b_ref, o_ref, acc_ref, *, activation):
    @pl.when(pl.program_id(2) == 0)
    def _():
        acc_ref[...] = jnp.zeros_like(acc_ref)

    acc_ref[...] += jnp.dot(x_ref[...], w_ref[...],
                            preferred_element_type=jnp.float32)

    @pl.when(pl.program_id(2) == pl.num_programs(2) - 1)
    def _():
        y = acc_ref[...] + b_ref[...].astype(jnp.float32)   # f32 epilogue
        if activation == "gelu":
            y = _gelu(y)
        o_ref[...] = y.astype(o_ref.dtype)


def linear(x, w, b, activation=None, tm=256, tn=256, tk=512):
    """y = act(x @ w + b), bf16 in / bf16 out, f32 accumulation on the MXU."""
    M, K = x.shape
    N = w.shape[1]
    tm = _tile(M, tm, 16)    # sublane dim (bf16 -> multiples of 16)
    tn = _tile(N, tn, 128)   # lane dim
    tk = _tile(K, tk, 128)   # lane dim of x / sublane dim of w
    grid = (M // tm, N // tn, K // tk)
    return pl.pallas_call(
        functools.partial(_matmul_kernel, activation=activation),
        out_shape=jax.ShapeDtypeStruct((M, N), jnp.bfloat16),
        grid=grid,
        in_specs=[pl.BlockSpec((tm, tk), lambda i, j, k: (i, k)),
                  pl.BlockSpec((tk, tn), lambda i, j, k: (k, j)),
                  pl.BlockSpec((1, tn), lambda i, j, k: (0, j))],
        out_specs=pl.BlockSpec((tm, tn), lambda i, j, k: (i, j)),
        scratch_shapes=[pltpu.VMEM((tm, tn), jnp.float32)],
        compiler_params=pltpu.CompilerParams(
            dimension_semantics=("parallel", "parallel", "arbitrary")),
    )(x, w, b.reshape(1, N))


# --------------- tiled matmul + bias + residual + LayerNorm fused ------------ #
# N (= hidden) is kept in a single lane-dense block so the row-wise LayerNorm
# can be computed in the f32 matmul epilogue.  Residual / bias / gamma / beta
# have K-invariant index maps, so they are DMA'd once per row block.

def _matmul_res_ln_kernel(x_ref, w_ref, b_ref, r_ref, g_ref, be_ref, o_ref,
                          acc_ref, *, eps):
    @pl.when(pl.program_id(1) == 0)
    def _():
        acc_ref[...] = jnp.zeros_like(acc_ref)

    acc_ref[...] += jnp.dot(x_ref[...], w_ref[...],
                            preferred_element_type=jnp.float32)

    @pl.when(pl.program_id(1) == pl.num_programs(1) - 1)
    def _():
        y = acc_ref[...] + b_ref[...].astype(jnp.float32)
        y = y + r_ref[...].astype(jnp.float32)               # fused residual add
        mu = jnp.mean(y, axis=-1, keepdims=True)
        var = jnp.mean((y - mu) ** 2, axis=-1, keepdims=True)
        y = (y - mu) * jax.lax.rsqrt(var + eps)
        y = y * g_ref[...].astype(jnp.float32) + be_ref[...].astype(jnp.float32)
        o_ref[...] = y.astype(o_ref.dtype)


def linear_residual_ln(x, w, b, residual, gamma, beta, eps=1e-12, tm=256, tk=512):
    """LayerNorm(x @ w + b + residual) * gamma + beta, bf16 in/out, f32 math."""
    M, K = x.shape
    N = w.shape[1]
    tm = _tile(M, tm, 16)
    tk = _tile(K, tk, 128)
    grid = (M // tm, K // tk)
    return pl.pallas_call(
        functools.partial(_matmul_res_ln_kernel, eps=eps),
        out_shape=jax.ShapeDtypeStruct((M, N), jnp.bfloat16),
        grid=grid,
        in_specs=[pl.BlockSpec((tm, tk), lambda i, k: (i, k)),
                  pl.BlockSpec((tk, N), lambda i, k: (k, 0)),
                  pl.BlockSpec((1, N), lambda i, k: (0, 0)),
                  pl.BlockSpec((tm, N), lambda i, k: (i, 0)),
                  pl.BlockSpec((1, N), lambda i, k: (0, 0)),
                  pl.BlockSpec((1, N), lambda i, k: (0, 0))],
        out_specs=pl.BlockSpec((tm, N), lambda i, k: (i, 0)),
        scratch_shapes=[pltpu.VMEM((tm, N), jnp.float32)],
        compiler_params=pltpu.CompilerParams(
            dimension_semantics=("parallel", "arbitrary")),
    )(x, w, b.reshape(1, N), residual, gamma.reshape(1, N), beta.reshape(1, N))


# ------------------------------ LayerNorm (rows) ------------------------------ #

def _ln_kernel(x_ref, g_ref, b_ref, o_ref, *, eps):
    x = x_ref[...].astype(jnp.float32)
    mu = jnp.mean(x, axis=-1, keepdims=True)
    var = jnp.mean((x - mu) ** 2, axis=-1, keepdims=True)
    y = (x - mu) * jax.lax.rsqrt(var + eps)
    y = y * g_ref[...].astype(jnp.float32) + b_ref[...].astype(jnp.float32)
    o_ref[...] = y.astype(o_ref.dtype)


def layernorm(x, g, b, eps=1e-12, block_rows=256):
    M, H = x.shape
    tm = _tile(M, block_rows, 16)
    row_spec = pl.BlockSpec((tm, H), lambda i: (i, 0))
    vec_spec = pl.BlockSpec((1, H), lambda i: (0, 0))
    return pl.pallas_call(
        functools.partial(_ln_kernel, eps=eps),
        out_shape=jax.ShapeDtypeStruct((M, H), x.dtype),
        grid=(M // tm,),
        in_specs=[row_spec, vec_spec, vec_spec],
        out_specs=row_spec,
        compiler_params=pltpu.CompilerParams(dimension_semantics=("parallel",)),
    )(x, g.reshape(1, H), b.reshape(1, H))


# ------------------------ flash-style self-attention ------------------------- #

def _attn_kernel(q_ref, k_ref, v_ref, msk_ref, o_ref, m_sc, l_sc, acc_sc, *, scale):
    ki = pl.program_id(2)

    @pl.when(ki == 0)
    def _():
        m_sc[...] = jnp.full(m_sc.shape, -jnp.inf, m_sc.dtype)
        l_sc[...] = jnp.zeros_like(l_sc)
        acc_sc[...] = jnp.zeros_like(acc_sc)

    q = q_ref[0]                             # (tq, D) bf16
    k = k_ref[0]                             # (tk, D) bf16
    # Q K^T without materializing a transpose: contract the head dim of both.
    s = jax.lax.dot_general(q, k, (((1,), (1,)), ((), ())),
                            preferred_element_type=jnp.float32) * scale
    s = s + msk_ref[0].astype(jnp.float32)   # additive mask, (1, tk) broadcasts

    m_prev = m_sc[...]
    m_new = jnp.maximum(m_prev, jnp.max(s, axis=-1, keepdims=True))
    alpha = jnp.exp(m_prev - m_new)
    p = jnp.exp(s - m_new)
    l_sc[...] = alpha * l_sc[...] + jnp.sum(p, axis=-1, keepdims=True)
    acc_sc[...] = alpha * acc_sc[...] + jnp.dot(p.astype(v_ref.dtype), v_ref[0],
                                                preferred_element_type=jnp.float32)
    m_sc[...] = m_new

    @pl.when(ki == pl.num_programs(2) - 1)
    def _():
        inv_l = pl.reciprocal(l_sc[...], approx=True)   # EUP, not VALU
        o_ref[0] = (acc_sc[...] * inv_l).astype(o_ref.dtype)


def attention(q, k, v, mask, scale, num_heads, tq=256, tkv=512):
    """q, k, v: [B*NH, S, D] bf16; mask: [B, 1, S] f32 additive."""
    BH, S, D = q.shape
    tq = _tile(S, tq, 16)
    tkv = _tile(S, tkv, 128)
    grid = (BH, S // tq, S // tkv)
    return pl.pallas_call(
        functools.partial(_attn_kernel, scale=scale),
        out_shape=jax.ShapeDtypeStruct((BH, S, D), q.dtype),
        grid=grid,
        in_specs=[pl.BlockSpec((1, tq, D), lambda b, qi, ki: (b, qi, 0)),
                  pl.BlockSpec((1, tkv, D), lambda b, qi, ki: (b, ki, 0)),
                  pl.BlockSpec((1, tkv, D), lambda b, qi, ki: (b, ki, 0)),
                  pl.BlockSpec((1, 1, tkv), lambda b, qi, ki: (b // num_heads, 0, ki))],
        out_specs=pl.BlockSpec((1, tq, D), lambda b, qi, ki: (b, qi, 0)),
        scratch_shapes=[pltpu.VMEM((tq, 1), jnp.float32),    # running max
                        pltpu.VMEM((tq, 1), jnp.float32),    # running sum
                        pltpu.VMEM((tq, D), jnp.float32)],   # accumulator
        compiler_params=pltpu.CompilerParams(
            dimension_semantics=("parallel", "parallel", "arbitrary")),
    )(q, k, v, mask)


# ----------------------- fused pooler + classifier head ---------------------- #

def _head_kernel(x_ref, w1_ref, b1_ref, w2_ref, b2_ref, o_ref):
    h = jnp.dot(x_ref[...], w1_ref[...], preferred_element_type=jnp.float32)
    h = jnp.tanh(h + b1_ref[...].astype(jnp.float32))      # BERT pooler: Linear + tanh
    # dropout: eval mode -> identity
    y = jnp.dot(h.astype(w2_ref.dtype), w2_ref[...], preferred_element_type=jnp.float32)
    o_ref[...] = y + b2_ref[...].astype(jnp.float32)


def classifier_head(x, w1, b1, w2, b2):
    # Tiny kernel (a few KiB): whole-block single-step launch is intentional.
    B, H = x.shape
    F = w2.shape[1]
    return pl.pallas_call(
        _head_kernel,
        out_shape=jax.ShapeDtypeStruct((B, F), jnp.float32),
        grid=(1,),
        in_specs=[pl.BlockSpec((B, H), lambda i: (0, 0)),
                  pl.BlockSpec((H, H), lambda i: (0, 0)),
                  pl.BlockSpec((1, H), lambda i: (0, 0)),
                  pl.BlockSpec((H, F), lambda i: (0, 0)),
                  pl.BlockSpec((1, F), lambda i: (0, 0))],
        out_specs=pl.BlockSpec((B, F), lambda i: (0, 0)),
    )(x, w1, b1.reshape(1, H), w2, b2.reshape(1, F))


# --------------------------- parameter construction -------------------------- #

def init_params(key, cfg):
    H, I, L = cfg["hidden"], cfg["intermediate"], cfg["layers"]
    keys = iter(jax.random.split(key, 8 + 4 * L))

    def nrm(shape):
        return (0.02 * jax.random.normal(next(keys), shape, jnp.float32)).astype(jnp.bfloat16)

    def zeros(shape):
        return jnp.zeros(shape, jnp.bfloat16)

    def ones(shape):
        return jnp.ones(shape, jnp.bfloat16)

    params = {
        "word_emb": nrm((cfg["vocab"], H)),
        "pos_emb": nrm((cfg["max_pos"], H)),
        "type_emb": nrm((cfg["type_vocab"], H)),
        "emb_ln_g": ones((H,)), "emb_ln_b": zeros((H,)),
        "layers": [],
        "pool_w": nrm((H, H)), "pool_b": zeros((H,)),
        "cls_w": nrm((H, cfg["features"])), "cls_b": zeros((cfg["features"],)),
    }
    for _ in range(L):
        params["layers"].append({
            "qkv_w": nrm((H, 3 * H)), "qkv_b": zeros((3 * H,)),   # fused Q|K|V
            "ao_w": nrm((H, H)), "ao_b": zeros((H,)),
            "a_ln_g": ones((H,)), "a_ln_b": zeros((H,)),
            "i_w": nrm((H, I)), "i_b": zeros((I,)),
            "o_w": nrm((I, H)), "o_b": zeros((H,)),
            "o_ln_g": ones((H,)), "o_ln_b": zeros((H,)),
        })
    return params


# ---------------------------------- forward ---------------------------------- #

def bert_module_forward(params, cfg, input_ids, attention_mask):
    B, S = input_ids.shape
    H, NH = cfg["hidden"], cfg["heads"]
    D = H // NH

    # Embeddings: table gathers are XLA glue; LayerNorm is a Pallas kernel.
    h = (params["word_emb"][input_ids]
         + params["pos_emb"][:S][None, :, :]
         + params["type_emb"][0][None, None, :]).astype(jnp.bfloat16)
    h = layernorm(h.reshape(B * S, H), params["emb_ln_g"], params["emb_ln_b"])

    # Extended additive attention mask, like HF: (1 - mask) * large_negative (kept f32).
    mask = ((1.0 - attention_mask.astype(jnp.float32)) * -1e9).reshape(B, 1, S)
    scale = 1.0 / math.sqrt(D)

    # TODO(synk): head split/merge stays as XLA layout glue; a D(=64)-wide lane
    # block would violate the 128-lane BlockSpec constraint, so index_map head
    # blocking is not used here.
    def split_heads(x):   # [B*S, H] -> [B*NH, S, D]
        return x.reshape(B, S, NH, D).transpose(0, 2, 1, 3).reshape(B * NH, S, D)

    def merge_heads(x):   # [B*NH, S, D] -> [B*S, H]
        return x.reshape(B, NH, S, D).transpose(0, 2, 1, 3).reshape(B * S, H)

    for lp in params["layers"]:
        qkv = linear(h, lp["qkv_w"], lp["qkv_b"])                  # fused QKV projection
        q = split_heads(qkv[:, :H])
        k = split_heads(qkv[:, H:2 * H])
        v = split_heads(qkv[:, 2 * H:])
        ctx = merge_heads(attention(q, k, v, mask, scale, NH))
        # attention output projection + residual + LayerNorm, one fused kernel
        h = linear_residual_ln(ctx, lp["ao_w"], lp["ao_b"], h,
                               lp["a_ln_g"], lp["a_ln_b"])
        inter = linear(h, lp["i_w"], lp["i_b"], activation="gelu")
        # FFN output projection + residual + LayerNorm, one fused kernel
        h = linear_residual_ln(inter, lp["o_w"], lp["o_b"], h,
                               lp["o_ln_g"], lp["o_ln_b"])

    cls = h.reshape(B, S, H)[:, 0]                                 # [B, H] CLS token
    # BertForSequenceClassification head: pooler(Linear+tanh) -> dropout(eval: id) -> classifier.
    logits = classifier_head(cls, params["pool_w"], params["pool_b"],
                             params["cls_w"], params["cls_b"])
    return logits.astype(jnp.bfloat16)   # bf16 module -> bf16 logits


# ------------------------------------ main ------------------------------------ #

if __name__ == "__main__":
    cfg = dict(vocab=128, hidden=32, heads=4, intermediate=64, layers=2,
               max_pos=16, type_vocab=2, features=3)

    key = jax.random.PRNGKey(0)
    pkey, ikey = jax.random.split(key)
    params = init_params(pkey, cfg)

    B, S = 2, 8
    input_ids = jax.random.randint(ikey, (B, S), 0, cfg["vocab"], dtype=jnp.int32)
    attention_mask = jnp.array([[1, 1, 1, 1, 1, 1, 1, 1],
                                [1, 1, 1, 1, 1, 0, 0, 0]], dtype=jnp.int32)

    logits = bert_module_forward(params, cfg, input_ids, attention_mask)
    jax.block_until_ready(logits)
    assert logits.shape == (B, cfg["features"])
    assert bool(jnp.all(jnp.isfinite(logits.astype(jnp.float32))))
    print("KERNEL_OK")
</pallas_src>

<mosaic_0001>
module attributes {stable_mosaic.version = 11 : i64} {
  func.func @_ln_kernel(%arg0: i32, %arg1: memref<16x32xbf16, #tpu.memory_space<vmem>>, %arg2: memref<1x32xbf16, #tpu.memory_space<vmem>>, %arg3: memref<1x32xbf16, #tpu.memory_space<vmem>>, %arg4: memref<16x32xbf16, #tpu.memory_space<vmem>>) attributes {dimension_semantics = [#tpu.dimension_semantics<parallel>], iteration_bounds = array<i64: 1>, scalar_prefetch = 0 : i64, scratch_operands = 0 : i64, tpu.core_type = #tpu.core_type<tc>, window_params = [{transform_indices = @transform_0, window_bounds = array<i64: 16, 32>}, {pipeline_mode = #tpu.pipeline_mode<synchronous>, transform_indices = @transform_1, window_bounds = array<i64: 1, 32>}, {pipeline_mode = #tpu.pipeline_mode<synchronous>, transform_indices = @transform_2, window_bounds = array<i64: 1, 32>}, {transform_indices = @transform_3, window_bounds = array<i64: 16, 32>}]} {
    %c0 = arith.constant 0 : index
    %c0_0 = arith.constant 0 : index
    %0 = vector.load %arg1[%c0, %c0_0] : memref<16x32xbf16, #tpu.memory_space<vmem>>, vector<16x32xbf16>
    %1 = arith.extf %0 : vector<16x32xbf16> to vector<16x32xf32>
    %cst = arith.constant dense<0.000000e+00> : vector<16xf32>
    %2 = vector.multi_reduction <add>, %1, %cst [1] : vector<16x32xf32> to vector<16xf32>
    %3 = vector.shape_cast %2 : vector<16xf32> to vector<16x1xf32>
    %cst_1 = arith.constant 3.200000e+01 : f32
    %4 = vector.broadcast %cst_1 : f32 to vector<16x1xf32>
    %5 = arith.divf %3, %4 : vector<16x1xf32>
    %6 = vector.broadcast %5 : vector<16x1xf32> to vector<16x32xf32>
    %7 = arith.subf %1, %6 : vector<16x32xf32>
    %8 = arith.mulf %7, %7 : vector<16x32xf32>
    %cst_2 = arith.constant dense<0.000000e+00> : vector<16xf32>
    %9 = vector.multi_reduction <add>, %8, %cst_2 [1] : vector<16x32xf32> to vector<16xf32>
    %10 = vector.shape_cast %9 : vector<16xf32> to vector<16x1xf32>
    %cst_3 = arith.constant 3.200000e+01 : f32
    %11 = vector.broadcast %cst_3 : f32 to vector<16x1xf32>
    %12 = arith.divf %10, %11 : vector<16x1xf32>
    %13 = vector.broadcast %5 : vector<16x1xf32> to vector<16x32xf32>
    %14 = arith.subf %1, %13 : vector<16x32xf32>
    %cst_4 = arith.constant 9.99999996E-13 : f32
    %15 = vector.broadcast %cst_4 : f32 to vector<16x1xf32>
    %16 = arith.addf %12, %15 : vector<16x1xf32>
    %17 = math.rsqrt %16 : vector<16x1xf32>
    %18 = vector.broadcast %17 : vector<16x1xf32> to vector<16x32xf32>
    %19 = arith.mulf %14, %18 : vector<16x32xf32>
    %c0_5 = arith.constant 0 : index
    %c0_6 = arith.constant 0 : index
    %20 = vector.load %arg2[%c0_5, %c0_6] : memref<1x32xbf16, #tpu.memory_space<vmem>>, vector<1x32xbf16>
    %21 = arith.extf %20 : vector<1x32xbf16> to vector<1x32xf32>
    %22 = vector.broadcast %21 : vector<1x32xf32> to vector<16x32xf32>
    %23 = arith.mulf %19, %22 : vector<16x32xf32>
    %c0_7 = arith.constant 0 : index
    %c0_8 = arith.constant 0 : index
    %24 = vector.load %arg3[%c0_7, %c0_8] : memref<1x32xbf16, #tpu.memory_space<vmem>>, vector<1x32xbf16>
    %25 = arith.extf %24 : vector<1x32xbf16> to vector<1x32xf32>
    %26 = vector.broadcast %25 : vector<1x32xf32> to vector<16x32xf32>
    %27 = arith.addf %23, %26 : vector<16x32xf32>
    %28 = arith.truncf %27 : vector<16x32xf32> to vector<16x32xbf16>
    %c0_9 = arith.constant 0 : index
    %c0_10 = arith.constant 0 : index
    %29 = vector.load %arg4[%c0_9, %c0_10] : memref<16x32xbf16, #tpu.memory_space<vmem>>, vector<16x32xbf16>
    tpu.vector_store %arg4[%c0_9, %c0_10], %28 {strides = array<i32>} : memref<16x32xbf16, #tpu.memory_space<vmem>>, vector<16x32xbf16>,
    return
  }
  func.func @transform_0(%arg0: i32) -> (i32, i32) {
    %c0_i32 = arith.constant 0 : i32
    %c0_i32_0 = arith.constant 0 : i32
    return %arg0, %c0_i32 : i32, i32
  }
  func.func @transform_1(%arg0: i32) -> (i32, i32) {
    %c0_i32 = arith.constant 0 : i32
    %c0_i32_0 = arith.constant 0 : i32
    %c0_i32_1 = arith.constant 0 : i32
    return %c0_i32, %c0_i32_0 : i32, i32
  }
  func.func @transform_2(%arg0: i32) -> (i32, i32) {
    %c0_i32 = arith.constant 0 : i32
    %c0_i32_0 = arith.constant 0 : i32
    %c0_i32_1 = arith.constant 0 : i32
    return %c0_i32, %c0_i32_0 : i32, i32
  }
  func.func @transform_3(%arg0: i32) -> (i32, i32) {
    %c0_i32 = arith.constant 0 : i32
    %c0_i32_0 = arith.constant 0 : i32
    return %arg0, %c0_i32 : i32, i32
  }
}

</mosaic_0001>

<llo_original>
// kernel: tpu_custom_call.1
$region0: #{tpu_custom_call.1}
  #allocation0 [shape = 'u32[]', space=smem, size = 0x4, offset = 0x4, fixed_abs, tag = 'smem constant byte address 0x4 - core index']
  #allocation1 [shape = 'u32[144,128]{1,0:T(1,128)}', space=vmem, size = 0x12000, scoped, tag = 'internal scratch']
  %s0 = inlined_call_operand.hbm [shape: bf16[16,32], index: 0, kind: input, shape index: {}]
  %s1 = inlined_call_operand.vmem [shape: bf16[1,32], index: 1, kind: input, shape index: {}]
  %s2 = inlined_call_operand.vmem [shape: bf16[1,32], index: 2, kind: input, shape index: {}]
  %s3 = inlined_call_operand.hbm [shape: bf16[16,32], index: 3, kind: output, shape index: {}]
  %s4 = sld [smem:[#allocation0]]
  $region26: #{tpu_custom_call.1} parent=0
    _
  %s6 = ssub.s32 1, %s4
  %s7 = scalar_select 0, %s6, %s4
  $region1: #{tpu_custom_call.1} parent=0
    #allocation2 [shape = 'u8[4096]{0}', space=vmem, size = 0x1000, scoped, tag = 'input window, operand 0, single buffered']
    #allocation3 [shape = 's32[1]{0}', space=sflag, size = 0x4, scoped, tag = 'scoped memory for tpu_custom_call.1']
    #allocation4 [shape = 's32[1]{0}', space=sflag, size = 0x4, scoped, tag = 'scoped memory for tpu_custom_call.1']
    #allocation5 [shape = 'u8[4096]{0}', space=vmem, size = 0x1000, scoped, tag = 'output window, operand 0, single buffered']
    %8 = vsyncpa [#allocation3], 0
    %9 = vsyncpa [#allocation4], 0
    // Predicated region
    $region2: #{tpu_custom_call.1} parent=1 // pred_check
      _
    $region3: #{tpu_custom_call.1} parent=1 // pred_check_branch
      %11 = sbr.rel (0) target = $region5
    $region4: #{tpu_custom_call.1} parent=1 // pred_region
      %s13 = ssub.s32 128, 128
      %14 = vsyncadd [#allocation3], %s13
      %s15 = sshll.u32 [#allocation2], 4
      %s16 = int_to_ptr.vmem [resolvable:$true] %s15
      %21 = dma.hbm_to_vmem [thread:$0]  %s0, 128, %s16, [#allocation3], 64, 64, 4
    $region5: #{tpu_custom_call.1} parent=1 // pred_fallthru
      _
    // Predicated region
    $region6: #{tpu_custom_call.1} parent=1 // pred_check
      _
    $region7: #{tpu_custom_call.1} parent=1 // pred_check_branch
      %23 = sbr.rel (0) target = $region9
    $region8: #{tpu_custom_call.1} parent=1 // pred_region
      _
    $region9: #{tpu_custom_call.1} parent=1 // pred_fallthru
      _
    // Predicated region
    $region10: #{tpu_custom_call.1} parent=1 // pred_check
      _
    $region11: #{tpu_custom_call.1} parent=1 // pred_check_branch
      %25 = sbr.rel (0) target = $region13
    $region12: #{tpu_custom_call.1} parent=1 // pred_region
      _
    $region13: #{tpu_custom_call.1} parent=1 // pred_fallthru
      _
    // Predicated region
    $region14: #{tpu_custom_call.1} parent=1 // pred_check
      _
    $region15: #{tpu_custom_call.1} parent=1 // pred_check_branch
      %27 = sbr.rel (0) target = $region17
    $region16: #{tpu_custom_call.1} parent=1 // pred_region
      %28 = dma.done [#allocation3], 128
    $region17: #{tpu_custom_call.1} parent=1 // pred_fallthru
      _
    %v29 = vld [vmem:[#allocation2] sm:$0xf]
    %v30 = vld [vmem:[#allocation2 + $0x4] sm:$0xf]
    %v31 = vunpack.c.l.bf16 %v29
    %v32 = vunpack.c.l.bf16 %v30
    %vm33 = vcmask 261120
    %v34 = vsel %vm33, %v31, 0.0
    %35 = vadd.xlane.f32.xlu0 %v34
    %v36 = vpop.xlane.xlu0 %35
    %v37 = vsel %vm33, %v32, 0.0
    %38 = vadd.xlane.f32.xlu0 %v37
    %v39 = vpop.xlane.xlu0 %38
    %v40 = vrcp.pop 32.0
    %v41 = vmul.f32 %v36, %v40
    %v42 = vmul.f32 %v39, %v40
    %v43 = vsub.f32 %v31, %v41
    %v44 = vsub.f32 %v32, %v42
    %v45 = vmul.f32 %v43, %v43
    %v46 = vmul.f32 %v44, %v44
    %v47 = vsel %vm33, %v45, 0.0
    %48 = vadd.xlane.f32.xlu0 %v47
    %v49 = vpop.xlane.xlu0 %48
    %v50 = vsel %vm33, %v46, 0.0
    %51 = vadd.xlane.f32.xlu0 %v50
    %v52 = vpop.xlane.xlu0 %51
    %v53 = vmul.f32 %v49, %v40
    %v54 = vmul.f32 %v52, %v40
    %v55 = vadd.f32 %v53, 1e-12
    %v56 = vadd.f32 %v54, 1e-12
    %v57 = vrsqrt.pop %v55
    %v58 = vrsqrt.pop %v56
    %v59 = vmul.f32 %v43, %v57
    %v60 = vmul.f32 %v44, %v58
    %v61 = vld [vmem:[%s1] sm:$0x1]
    %v62 = vunpack.c.l.bf16 %v61
    %v63 = vlaneseq
    %v64 = vshrl.u32 %v63, 7
    %v65 = vsub.s32 0, %v64
    %v66 = vrot.slane %v62, %v65
    %v67 = vmul.f32 %v59, %v66
    %v68 = vmul.f32 %v60, %v66
    %v69 = vld [vmem:[%s2] sm:$0x1]
    %v70 = vunpack.c.l.bf16 %v69
    %v71 = vlaneseq
    %v72 = vshrl.u32 %v71, 7
    %v73 = vsub.s32 0, %v72
    %v74 = vrot.slane %v70, %v73
    %v75 = vadd.f32 %v67, %v74
    %v76 = vadd.f32 %v68, %v74
    %v77 = vpack.c.bf16 %v76, %v75
    %v79 = vunpack.c.l.b16 %v77
    %v80 = vunpack.c.h.b16 %v77
    %v81 = vpack.c.b16 %v79, %v79
    %v82 = vpack.c.b16 %v80, %v80
    %vm85 = vcmask 257024
    %86 = vst.msk [vmem:[#allocation5] sm:$0xf] %vm85, %v81
    %87 = vst.msk [vmem:[#allocation5 + $0x4] sm:$0xf] %vm85, %v82
    // Predicated region
    $region18: #{tpu_custom_call.1} parent=1 // pred_check
      _
    $region19: #{tpu_custom_call.1} parent=1 // pred_check_branch
      %89 = sbr.rel (0) target = $region21
    $region20: #{tpu_custom_call.1} parent=1 // pred_region
      %s91 = ssub.s32 128, 128
      %92 = vsyncadd [#allocation4], %s91
      %s93 = sshll.u32 [#allocation5], 4
      %s94 = int_to_ptr.vmem [resolvable:$true] %s93
      %99 = dma.vmem_to_hbm [thread:$0]  %s94, 128, %s3, [#allocation4], 64, 64, 4
    $region21: #{tpu_custom_call.1} parent=1 // pred_fallthru
      _
    // Predicated region
    $region22: #{tpu_custom_call.1} parent=1 // pred_check
      _
    $region23: #{tpu_custom_call.1} parent=1 // pred_check_branch
      %101 = sbr.rel (0) target = $region25
    $region24: #{tpu_custom_call.1} parent=1 // pred_region
      %102 = dma.done [#allocation4], 128
    $region25: #{tpu_custom_call.1} parent=1 // pred_fallthru
      _
    %103 = vsyncpa [#allocation3], 1
    %104 = vsyncpa [#allocation4], 1

</llo_original>
